<compile_context>
chip_gen: v6e
topology: v6e:2x2x1
jax: 0.10.0
libtpu: 0.0.40
codegen_flags: <defaults>
</compile_context>

<pallas_src>
import functools

import jax
import jax.numpy as jnp
from jax.experimental import pallas as pl
from jax.experimental.pallas import tpu as pltpu


def _ffn_kernel(x_ref, w1_ref, b1_ref, w2_ref, b2_ref, o_ref):
    # x_ref : (TM, d_model)    token tile
    # w1_ref: (d_ff, d_model)  PyTorch w_1.weight (out, in) -- NOT transposed
    # b1_ref: (1, d_ff)
    # w2_ref: (d_model, d_ff)  PyTorch w_2.weight (out, in) -- NOT transposed
    # b2_ref: (1, d_model)
    x = x_ref[...]

    # First linear: x @ w1^T  (contract feature dims), f32 accumulation on MXU.
    h = jax.lax.dot_general(
        x, w1_ref[...],
        dimension_numbers=(((1,), (1,)), ((), ())),
        preferred_element_type=jnp.float32)                 # (TM, d_ff)
    h = jnp.maximum(h + b1_ref[...], 0.0)                   # bias + ReLU (VPU)

    # Second linear: h @ w2^T. Cast h back to the compute dtype (bf16 in / f32
    # accumulate gets full MXU rate; no-op for f32 inputs).
    y = jax.lax.dot_general(
        h.astype(x.dtype), w2_ref[...],
        dimension_numbers=(((1,), (1,)), ((), ())),
        preferred_element_type=jnp.float32)                 # (TM, d_model)
    o_ref[...] = (y + b2_ref[...]).astype(o_ref.dtype)


@functools.partial(jax.jit, static_argnames=("tm",))
def positionwise_ffn(x, w1, b1, w2, b2, *, tm=256):
    """x: (batch, seq, d_model); w1: (d_ff, d_model); w2: (d_model, d_ff).

    Weights are consumed in their native PyTorch nn.Linear layout (out, in);
    no HBM transpose pass is performed per call.
    """
    batch, seq, d_model = x.shape
    d_ff = w1.shape[0]
    n = batch * seq

    x2d = x.reshape(n, d_model)
    b1_2d = b1.reshape(1, d_ff)
    b2_2d = b2.reshape(1, d_model)

    # Token tile: full n when small, otherwise `tm` rows (multiple of 8).
    tm_eff = n if n <= tm else tm
    n_pad = pl.cdiv(n, tm_eff) * tm_eff
    if n_pad != n:
        x2d = jnp.pad(x2d, ((0, n_pad - n), (0, 0)))
    grid = (n_pad // tm_eff,)

    # VMEM budget: resident weights/biases + double-buffered x/out tiles +
    # the f32 hidden intermediate; ~50% headroom, clamped for v7x (64 MiB).
    itemsize = jnp.dtype(x.dtype).itemsize
    w_itemsize = jnp.dtype(w1.dtype).itemsize
    weight_bytes = (w1.size + w2.size) * w_itemsize + (b1.size + b2.size) * w_itemsize
    stream_bytes = 2 * 2 * tm_eff * d_model * itemsize      # dbl-buffered x + out
    hidden_bytes = tm_eff * d_ff * 4                         # f32 h tile
    vmem_limit = int(1.5 * (weight_bytes + stream_bytes + hidden_bytes))
    vmem_limit = max(vmem_limit, 32 * 1024 * 1024)
    vmem_limit = min(vmem_limit, 60 * 1024 * 1024)

    cost = pl.CostEstimate(
        flops=2 * 2 * n_pad * d_model * d_ff,                # two matmuls
        transcendentals=0,
        bytes_accessed=(2 * n_pad * d_model * itemsize       # x read + y write
                        + weight_bytes),
    )

    out2d = pl.pallas_call(
        _ffn_kernel,
        out_shape=jax.ShapeDtypeStruct((n_pad, d_model), x.dtype),
        grid_spec=pltpu.PrefetchScalarGridSpec(
            num_scalar_prefetch=0,
            grid=grid,
            in_specs=[
                pl.BlockSpec((tm_eff, d_model), lambda i: (i, 0)),  # streamed
                pl.BlockSpec((d_ff, d_model), lambda i: (0, 0)),    # resident
                pl.BlockSpec((1, d_ff), lambda i: (0, 0)),          # resident
                pl.BlockSpec((d_model, d_ff), lambda i: (0, 0)),    # resident
                pl.BlockSpec((1, d_model), lambda i: (0, 0)),       # resident
            ],
            out_specs=pl.BlockSpec((tm_eff, d_model), lambda i: (i, 0)),
        ),
        compiler_params=pltpu.CompilerParams(
            dimension_semantics=("parallel",),   # shard token tiles across TCs
            vmem_limit_bytes=vmem_limit,
        ),
        cost_estimate=cost,
    )(x2d, w1, b1_2d, w2, b2_2d)

    if n_pad != n:
        out2d = out2d[:n]
    return out2d.reshape(batch, seq, d_model)


def _reference(x, w1, b1, w2, b2):
    return jnp.maximum(x @ w1.T + b1, 0.0) @ w2.T + b2


def _make_inputs(key, batch, seq, d_model, d_ff, dtype=jnp.float32):
    kx, kw1, kb1, kw2, kb2 = jax.random.split(key, 5)
    x = jax.random.normal(kx, (batch, seq, d_model), dtype=dtype)
    # PyTorch nn.Linear parameter shapes: weight (out, in), bias (out,)
    w1 = jax.random.normal(kw1, (d_ff, d_model), dtype=dtype) * 0.1
    b1 = jax.random.normal(kb1, (d_ff,), dtype=dtype) * 0.1
    w2 = jax.random.normal(kw2, (d_model, d_ff), dtype=dtype) * 0.1
    b2 = jax.random.normal(kb2, (d_model,), dtype=dtype) * 0.1
    return x, w1, b1, w2, b2


if __name__ == "__main__":
    key = jax.random.PRNGKey(0)
    k_small, k_big = jax.random.split(key)

    # Small config consistent with the module's toy usage.
    x, w1, b1, w2, b2 = _make_inputs(k_small, batch=2, seq=8, d_model=32, d_ff=64)
    out = positionwise_ffn(x, w1, b1, w2, b2)
    jax.block_until_ready(out)
    ref = _reference(x, w1, b1, w2, b2)
    assert out.shape == x.shape
    assert jnp.allclose(out, ref, atol=1e-4, rtol=1e-4)

    # 128-aligned config exercising the tiled / pipelined path (grid > 1).
    xb, w1b, b1b, w2b, b2b = _make_inputs(
        k_big, batch=2, seq=256, d_model=128, d_ff=256)
    outb = positionwise_ffn(xb, w1b, b1b, w2b, b2b, tm=256)
    jax.block_until_ready(outb)
    refb = _reference(xb, w1b, b1b, w2b, b2b)
    assert outb.shape == xb.shape
    assert jnp.allclose(outb, refb, atol=2e-3, rtol=2e-3)

    print("KERNEL_OK")
</pallas_src>

<mosaic_0001>
module attributes {stable_mosaic.version = 11 : i64} {
  func.func @_ffn_kernel(%arg0: i32, %arg1: memref<16x32xf32, #tpu.memory_space<vmem>>, %arg2: memref<64x32xf32, #tpu.memory_space<vmem>>, %arg3: memref<1x64xf32, #tpu.memory_space<vmem>>, %arg4: memref<32x64xf32, #tpu.memory_space<vmem>>, %arg5: memref<1x32xf32, #tpu.memory_space<vmem>>, %arg6: memref<16x32xf32, #tpu.memory_space<vmem>>) attributes {dimension_semantics = [#tpu.dimension_semantics<parallel>], iteration_bounds = array<i64: 1>, scalar_prefetch = 0 : i64, scratch_operands = 0 : i64, tpu.core_type = #tpu.core_type<tc>, window_params = [{transform_indices = @transform_0, window_bounds = array<i64: 16, 32>}, {pipeline_mode = #tpu.pipeline_mode<synchronous>, transform_indices = @transform_1, window_bounds = array<i64: 64, 32>}, {pipeline_mode = #tpu.pipeline_mode<synchronous>, transform_indices = @transform_2, window_bounds = array<i64: 1, 64>}, {pipeline_mode = #tpu.pipeline_mode<synchronous>, transform_indices = @transform_3, window_bounds = array<i64: 32, 64>}, {pipeline_mode = #tpu.pipeline_mode<synchronous>, transform_indices = @transform_4, window_bounds = array<i64: 1, 32>}, {transform_indices = @transform_5, window_bounds = array<i64: 16, 32>}]} {
    %c0 = arith.constant 0 : index
    %c0_0 = arith.constant 0 : index
    %0 = vector.load %arg1[%c0, %c0_0] : memref<16x32xf32, #tpu.memory_space<vmem>>, vector<16x32xf32>
    %c0_1 = arith.constant 0 : index
    %c0_2 = arith.constant 0 : index
    %1 = vector.load %arg2[%c0_1, %c0_2] : memref<64x32xf32, #tpu.memory_space<vmem>>, vector<64x32xf32>
    %cst = arith.constant dense<0.000000e+00> : vector<16x64xf32>
    %2 = tpu.matmul %0, %1, %cst {dimension_numbers = #tpu.dot_dimension_numbers<[1], [1], [0], [0], [0, 0, 1, 0], [], []>} : vector<16x32xf32>, vector<64x32xf32>, vector<16x64xf32> -> vector<16x64xf32>
    %c0_3 = arith.constant 0 : index
    %c0_4 = arith.constant 0 : index
    %3 = vector.load %arg3[%c0_3, %c0_4] : memref<1x64xf32, #tpu.memory_space<vmem>>, vector<1x64xf32>
    %4 = vector.broadcast %3 : vector<1x64xf32> to vector<16x64xf32>
    %5 = arith.addf %2, %4 : vector<16x64xf32>
    %cst_5 = arith.constant 0.000000e+00 : f32
    %6 = vector.broadcast %cst_5 : f32 to vector<16x64xf32>
    %7 = arith.maximumf %5, %6 : vector<16x64xf32>
    %c0_6 = arith.constant 0 : index
    %c0_7 = arith.constant 0 : index
    %8 = vector.load %arg4[%c0_6, %c0_7] : memref<32x64xf32, #tpu.memory_space<vmem>>, vector<32x64xf32>
    %cst_8 = arith.constant dense<0.000000e+00> : vector<16x32xf32>
    %9 = tpu.matmul %7, %8, %cst_8 {dimension_numbers = #tpu.dot_dimension_numbers<[1], [1], [0], [0], [0, 0, 1, 0], [], []>} : vector<16x64xf32>, vector<32x64xf32>, vector<16x32xf32> -> vector<16x32xf32>
    %c0_9 = arith.constant 0 : index
    %c0_10 = arith.constant 0 : index
    %10 = vector.load %arg5[%c0_9, %c0_10] : memref<1x32xf32, #tpu.memory_space<vmem>>, vector<1x32xf32>
    %11 = vector.broadcast %10 : vector<1x32xf32> to vector<16x32xf32>
    %12 = arith.addf %9, %11 : vector<16x32xf32>
    %c0_11 = arith.constant 0 : index
    %c0_12 = arith.constant 0 : index
    %13 = vector.load %arg6[%c0_11, %c0_12] : memref<16x32xf32, #tpu.memory_space<vmem>>, vector<16x32xf32>
    tpu.vector_store %arg6[%c0_11, %c0_12], %12 {strides = array<i32>} : memref<16x32xf32, #tpu.memory_space<vmem>>, vector<16x32xf32>,
    return
  }
  func.func @transform_0(%arg0: i32) -> (i32, i32) {
    %c0_i32 = arith.constant 0 : i32
    %c0_i32_0 = arith.constant 0 : i32
    return %arg0, %c0_i32 : i32, i32
  }
  func.func @transform_1(%arg0: i32) -> (i32, i32) {
    %c0_i32 = arith.constant 0 : i32
    %c0_i32_0 = arith.constant 0 : i32
    %c0_i32_1 = arith.constant 0 : i32
    return %c0_i32, %c0_i32_0 : i32, i32
  }
  func.func @transform_2(%arg0: i32) -> (i32, i32) {
    %c0_i32 = arith.constant 0 : i32
    %c0_i32_0 = arith.constant 0 : i32
    %c0_i32_1 = arith.constant 0 : i32
    return %c0_i32, %c0_i32_0 : i32, i32
  }
  func.func @transform_3(%arg0: i32) -> (i32, i32) {
    %c0_i32 = arith.constant 0 : i32
    %c0_i32_0 = arith.constant 0 : i32
    %c0_i32_1 = arith.constant 0 : i32
    return %c0_i32, %c0_i32_0 : i32, i32
  }
  func.func @transform_4(%arg0: i32) -> (i32, i32) {
    %c0_i32 = arith.constant 0 : i32
    %c0_i32_0 = arith.constant 0 : i32
    %c0_i32_1 = arith.constant 0 : i32
    return %c0_i32, %c0_i32_0 : i32, i32
  }
  func.func @transform_5(%arg0: i32) -> (i32, i32) {
    %c0_i32 = arith.constant 0 : i32
    %c0_i32_0 = arith.constant 0 : i32
    return %arg0, %c0_i32 : i32, i32
  }
}

</mosaic_0001>

<llo_original>
// kernel: positionwise_ffn.1
$region0: #{positionwise_ffn.1}
  #allocation0 [shape = 'u32[]', space=smem, size = 0x4, offset = 0x4, fixed_abs, tag = 'smem constant byte address 0x4 - core index']
  #allocation1 [shape = 'u32[144,128]{1,0:T(1,128)}', space=vmem, size = 0x12000, scoped, tag = 'internal scratch']
  %s0 = inlined_call_operand.vmem [shape: f32[16,32], index: 0, kind: input, shape index: {}]
  %s1 = inlined_call_operand.vmem [shape: f32[64,32], index: 1, kind: input, shape index: {}]
  %s2 = inlined_call_operand.vmem [shape: f32[1,64], index: 2, kind: input, shape index: {}]
  %s3 = inlined_call_operand.vmem [shape: f32[32,64], index: 3, kind: input, shape index: {}]
  %s4 = inlined_call_operand.vmem [shape: f32[1,32], index: 4, kind: input, shape index: {}]
  %s5 = inlined_call_operand.hbm [shape: f32[16,32], index: 5, kind: output, shape index: {}]
  %s6 = sld [smem:[#allocation0]]
  $region30: #{positionwise_ffn.1} parent=0
    _
  %s8 = ssub.s32 1, %s6
  %s9 = scalar_select 0, %s8, %s6
  $region1: #{positionwise_ffn.1} parent=0
    #allocation2 [shape = 'u8[8192]{0}', space=vmem, size = 0x2000, scoped, tag = 'output window, operand 0, single buffered']
    #allocation3 [shape = 's32[1]{0}', space=sflag, size = 0x4, scoped, tag = 'scoped memory for positionwise_ffn.1']
    %10 = vsyncpa [#allocation3], 0
    // Predicated region
    $region2: #{positionwise_ffn.1} parent=1 // pred_check
      _
    $region3: #{positionwise_ffn.1} parent=1 // pred_check_branch
      %12 = sbr.rel (0) target = $region5
    $region4: #{positionwise_ffn.1} parent=1 // pred_region
      _
    $region5: #{positionwise_ffn.1} parent=1 // pred_fallthru
      _
    // Predicated region
    $region6: #{positionwise_ffn.1} parent=1 // pred_check
      _
    $region7: #{positionwise_ffn.1} parent=1 // pred_check_branch
      %14 = sbr.rel (0) target = $region9
    $region8: #{positionwise_ffn.1} parent=1 // pred_region
      _
    $region9: #{positionwise_ffn.1} parent=1 // pred_fallthru
      _
    // Predicated region
    $region10: #{positionwise_ffn.1} parent=1 // pred_check
      _
    $region11: #{positionwise_ffn.1} parent=1 // pred_check_branch
      %16 = sbr.rel (0) target = $region13
    $region12: #{positionwise_ffn.1} parent=1 // pred_region
      _
    $region13: #{positionwise_ffn.1} parent=1 // pred_fallthru
      _
    // Predicated region
    $region14: #{positionwise_ffn.1} parent=1 // pred_check
      _
    $region15: #{positionwise_ffn.1} parent=1 // pred_check_branch
      %18 = sbr.rel (0) target = $region17
    $region16: #{positionwise_ffn.1} parent=1 // pred_region
      _
    $region17: #{positionwise_ffn.1} parent=1 // pred_fallthru
      _
    // Predicated region
    $region18: #{positionwise_ffn.1} parent=1 // pred_check
      _
    $region19: #{positionwise_ffn.1} parent=1 // pred_check_branch
      %20 = sbr.rel (0) target = $region21
    $region20: #{positionwise_ffn.1} parent=1 // pred_region
      _
    $region21: #{positionwise_ffn.1} parent=1 // pred_fallthru
      _
    %v21 = vld [vmem:[%s0] sm:$0xff]
    %v22 = vld [vmem:[%s0 + $0x8] sm:$0xff]
    %v23 = vld [vmem:[%s1] sm:$0xff]
    %v24 = vld [vmem:[%s1 + $0x8] sm:$0xff]
    %v25 = vld [vmem:[%s1 + $0x10] sm:$0xff]
    %v26 = vld [vmem:[%s1 + $0x18] sm:$0xff]
    %v27 = vld [vmem:[%s1 + $0x20] sm:$0xff]
    %v28 = vld [vmem:[%s1 + $0x28] sm:$0xff]
    %v29 = vld [vmem:[%s1 + $0x30] sm:$0xff]
    %v30 = vld [vmem:[%s1 + $0x38] sm:$0xff]
    %v31 = vld [vmem:[%s2] sm:$0x1]
    %v33 = vlaneseq
    %v34 = vshrl.u32 %v33, 7
    %v35 = vsub.s32 0, %v34
    %v36 = vrot.slane %v31, %v35
    %vm38 = vcmask 261120
    %v40 = vsel %vm38, %v21, 0
    %v43 = vsel %vm38, %v22, 0
    %v46 = vsel %vm38, %v23, 0
    %v49 = vsel %vm38, %v24, 0
    %v52 = vsel %vm38, %v25, 0
    %v55 = vsel %vm38, %v26, 0
    %v58 = vsel %vm38, %v27, 0
    %v61 = vsel %vm38, %v28, 0
    %v64 = vsel %vm38, %v29, 0
    %v67 = vsel %vm38, %v30, 0
    %69 = vmatprep.subr.mxu0 0.0
    %70 = vmatpush1.xpose.msra.mxu0 0.0
    %71 = vmatprep.subr.mxu0 0.0
    %72 = vmatpush1.xpose.msra.mxu0 0.0
    %73 = vmatprep.subr.mxu0 0.0
    %74 = vmatpush1.xpose.msra.mxu0 0.0
    %75 = vmatprep.subr.mxu0 0.0
    %76 = vmatpush1.xpose.msra.mxu0 0.0
    %77 = vmatprep.subr.mxu0 0.0
    %78 = vmatpush1.xpose.msra.mxu0 0.0
    %79 = vmatprep.subr.mxu0 0.0
    %80 = vmatpush1.xpose.msra.mxu0 0.0
    %81 = vmatprep.subr.mxu0 0.0
    %82 = vmatpush1.xpose.msra.mxu0 0.0
    %83 = vmatprep.subr.mxu0 0.0
    %84 = vmatpush1.xpose.msra.mxu0 0.0
    %85 = vmatprep.subr.mxu0 0.0
    %86 = vmatpush1.xpose.msra.mxu0 %v67
    %87 = vmatprep.subr.mxu0 0.0
    %88 = vmatpush1.xpose.msra.mxu0 %v64
    %89 = vmatprep.subr.mxu0 0.0
    %90 = vmatpush1.xpose.msra.mxu0 %v61
    %91 = vmatprep.subr.mxu0 0.0
    %92 = vmatpush1.xpose.msra.mxu0 %v58
    %93 = vmatprep.subr.mxu0 0.0
    %94 = vmatpush1.xpose.msra.mxu0 %v55
    %95 = vmatprep.subr.mxu0 0.0
    %96 = vmatpush1.xpose.msra.mxu0 %v52
    %97 = vmatprep.subr.mxu0 0.0
    %98 = vmatpush1.xpose.msra.mxu0 %v49
    %99 = vmatprep.subr.mxu0 0.0
    %100 = vmatpush1.xpose.msra.mxu0 %v46
    %101 = vmatprep.subr.mxu0 0.0
    %102 = vmatpush2.xpose.msra.mxu0 0.0
    %103 = vmatprep.subr.mxu0 0.0
    %104 = vmatpush2.xpose.msra.mxu0 0.0
    %105 = vmatprep.subr.mxu0 0.0
    %106 = vmatpush2.xpose.msra.mxu0 0.0
    %107 = vmatprep.subr.mxu0 0.0
    %108 = vmatpush2.xpose.msra.mxu0 0.0
    %109 = vmatprep.subr.mxu0 0.0
    %110 = vmatpush2.xpose.msra.mxu0 0.0
    %111 = vmatprep.subr.mxu0 0.0
    %112 = vmatpush2.xpose.msra.mxu0 0.0
    %113 = vmatprep.subr.mxu0 0.0
    %114 = vmatpush2.xpose.msra.mxu0 0.0
    %115 = vmatprep.subr.mxu0 0.0
    %116 = vmatpush2.xpose.msra.mxu0 0.0
    %117 = vmatprep.subr.mxu0 0.0
    %118 = vmatpush2.xpose.msra.mxu0 0.0
    %119 = vmatprep.subr.mxu0 0.0
    %120 = vmatpush2.xpose.msra.mxu0 0.0
    %121 = vmatprep.subr.mxu0 0.0
    %122 = vmatpush2.xpose.msra.mxu0 0.0
    %123 = vmatprep.subr.mxu0 0.0
    %124 = vmatpush2.xpose.msra.mxu0 0.0
    %125 = vmatprep.subr.mxu0 0.0
    %126 = vmatpush2.xpose.msra.mxu0 0.0
    %127 = vmatprep.subr.mxu0 0.0
    %128 = vmatpush2.xpose.msra.mxu0 0.0
    %129 = vmatprep.subr.mxu0 0.0
    %130 = vmatpush2.xpose.msra.mxu0 0.0
    %131 = vmatprep.subr.mxu0 0.0
    %132 = vmatpush2.xpose.msra.mxu0 0.0
    %133 = vmatprep.mubr.f32.mxu0 0.0
    %134 = vmatmul.mubr.f32.gmra.mxu0 %v40
    %v135 = vpop.f32.mrf.mxu0
    %v136 = vadd.f32 %v36, %v135
    %v137 = vpop.f32.mrf.mxu0
    %138 = vmatprep.mubr.f32.mxu0 0.0
    %139 = vmatmul.mubr.f32.gmra.mxu0 %v43
    %v140 = vpop.f32.mrf.mxu0
    %v141 = vadd.f32 %v36, %v140
    %v142 = vpop.f32.mrf.mxu0
    %143 = vdwg.mxu0
    %v144 = vmax.f32 %v136, 0.0
    %v145 = vmax.f32 %v141, 0.0
    %v146 = vld [vmem:[%s3] sm:$0xff]
    %v147 = vld [vmem:[%s3 + $0x8] sm:$0xff]
    %v148 = vld [vmem:[%s3 + $0x10] sm:$0xff]
    %v149 = vld [vmem:[%s3 + $0x18] sm:$0xff]
    %v150 = vld [vmem:[%s4] sm:$0x1]
    %v152 = vlaneseq
    %v153 = vshrl.u32 %v152, 7
    %v154 = vsub.s32 0, %v153
    %v155 = vrot.slane %v150, %v154
    %vm157 = vcmask 523264
    %v159 = vsel %vm157, %v144, 0
    %v162 = vsel %vm157, %v145, 0
    %v165 = vsel %vm157, %v146, 0
    %v168 = vsel %vm157, %v147, 0
    %v171 = vsel %vm157, %v148, 0
    %v174 = vsel %vm157, %v149, 0
    %176 = vmatprep.subr.mxu0 0.0
    %177 = vmatpush1.xpose.msra.mxu0 0.0
    %178 = vmatprep.subr.mxu0 0.0
    %179 = vmatpush1.xpose.msra.mxu0 0.0
    %180 = vmatprep.subr.mxu0 0.0
    %181 = vmatpush1.xpose.msra.mxu0 0.0
    %182 = vmatprep.subr.mxu0 0.0
    %183 = vmatpush1.xpose.msra.mxu0 0.0
    %184 = vmatprep.subr.mxu0 0.0
    %185 = vmatpush1.xpose.msra.mxu0 0.0
    %186 = vmatprep.subr.mxu0 0.0
    %187 = vmatpush1.xpose.msra.mxu0 0.0
    %188 = vmatprep.subr.mxu0 0.0
    %189 = vmatpush1.xpose.msra.mxu0 0.0
    %190 = vmatprep.subr.mxu0 0.0
    %191 = vmatpush1.xpose.msra.mxu0 0.0
    %192 = vmatprep.subr.mxu0 0.0
    %193 = vmatpush1.xpose.msra.mxu0 0.0
    %194 = vmatprep.subr.mxu0 0.0
    %195 = vmatpush1.xpose.msra.mxu0 0.0
    %196 = vmatprep.subr.mxu0 0.0
    %197 = vmatpush1.xpose.msra.mxu0 0.0
    %198 = vmatprep.subr.mxu0 0.0
    %199 = vmatpush1.xpose.msra.mxu0 0.0
    %200 = vmatprep.subr.mxu0 0.0
    %201 = vmatpush1.xpose.msra.mxu0 %v174
    %202 = vmatprep.subr.mxu0 0.0
    %203 = vmatpush1.xpose.msra.mxu0 %v171
    %204 = vmatprep.subr.mxu0 0.0
    %205 = vmatpush1.xpose.msra.mxu0 %v168
    %206 = vmatprep.subr.mxu0 0.0
    %207 = vmatpush1.xpose.msra.mxu0 %v165
    %208 = vmatprep.subr.mxu0 0.0
    %209 = vmatpush2.xpose.msra.mxu0 0.0
    %210 = vmatprep.subr.mxu0 0.0
    %211 = vmatpush2.xpose.msra.mxu0 0.0
    %212 = vmatprep.subr.mxu0 0.0
    %213 = vmatpush2.xpose.msra.mxu0 0.0
    %214 = vmatprep.subr.mxu0 0.0
    %215 = vmatpush2.xpose.msra.mxu0 0.0
    %216 = vmatprep.subr.mxu0 0.0
    %217 = vmatpush2.xpose.msra.mxu0 0.0
    %218 = vmatprep.subr.mxu0 0.0
    %219 = vmatpush2.xpose.msra.mxu0 0.0
    %220 = vmatprep.subr.mxu0 0.0
    %221 = vmatpush2.xpose.msra.mxu0 0.0
    %222 = vmatprep.subr.mxu0 0.0
    %223 = vmatpush2.xpose.msra.mxu0 0.0
    %224 = vmatprep.subr.mxu0 0.0
    %225 = vmatpush2.xpose.msra.mxu0 0.0
    %226 = vmatprep.subr.mxu0 0.0
    %227 = vmatpush2.xpose.msra.mxu0 0.0
    %228 = vmatprep.subr.mxu0 0.0
    %229 = vmatpush2.xpose.msra.mxu0 0.0
    %230 = vmatprep.subr.mxu0 0.0
    %231 = vmatpush2.xpose.msra.mxu0 0.0
    %232 = vmatprep.subr.mxu0 0.0
    %233 = vmatpush2.xpose.msra.mxu0 0.0
    %234 = vmatprep.subr.mxu0 0.0
    %235 = vmatpush2.xpose.msra.mxu0 0.0
    %236 = vmatprep.subr.mxu0 0.0
    %237 = vmatpush2.xpose.msra.mxu0 0.0
    %238 = vmatprep.subr.mxu0 0.0
    %239 = vmatpush2.xpose.msra.mxu0 0.0
    %240 = vmatprep.mubr.f32.mxu0 0.0
    %241 = vmatmul.mubr.f32.gmra.mxu0 %v159
    %v242 = vpop.f32.mrf.mxu0
    %v243 = vadd.f32 %v155, %v242
    %v244 = vpop.f32.mrf.mxu0
    %245 = vmatprep.mubr.f32.mxu0 0.0
    %246 = vmatmul.mubr.f32.gmra.mxu0 %v162
    %v247 = vpop.f32.mrf.mxu0
    %v248 = vadd.f32 %v155, %v247
    %v249 = vpop.f32.mrf.mxu0
    %250 = vdwg.mxu0
    %251 = vst.msk [vmem:[#allocation2] sm:$0xff] %vm38, %v243
    %252 = vst.msk [vmem:[#allocation2 + $0x8] sm:$0xff] %vm38, %v248
    // Predicated region
    $region22: #{positionwise_ffn.1} parent=1 // pred_check
      _
    $region23: #{positionwise_ffn.1} parent=1 // pred_check_branch
      %254 = sbr.rel (0) target = $region25
    $region24: #{positionwise_ffn.1} parent=1 // pred_region
      %s256 = ssub.s32 256, 256
      %257 = vsyncadd [#allocation3], %s256
      %s258 = sshll.u32 [#allocation2], 4
      %s259 = int_to_ptr.vmem [resolvable:$true] %s258
      %264 = dma.vmem_to_hbm [thread:$0]  %s259, 256, %s5, [#allocation3], 128, 128, 8
    $region25: #{positionwise_ffn.1} parent=1 // pred_fallthru
      _
    // Predicated region
    $region26: #{positionwise_ffn.1} parent=1 // pred_check
      _
    $region27: #{positionwise_ffn.1} parent=1 // pred_check_branch
      %266 = sbr.rel (0) target = $region29
    $region28: #{positionwise_ffn.1} parent=1 // pred_region
      %267 = dma.done [#allocation3], 256
    $region29: #{positionwise_ffn.1} parent=1 // pred_fallthru
      _
    %268 = vsyncpa [#allocation3], 1

</llo_original>
